<compile_context>
chip_gen: v5e
topology: v5e:2x2
jax: 0.10.0
libtpu: 0.0.40
codegen_flags: <defaults>
</compile_context>

<pallas_src>
import functools

import jax
import jax.numpy as jnp
import numpy as np
from jax.experimental import pallas as pl
from jax.experimental.pallas import tpu as pltpu

GROUPS = 8
EPS = 1e-5


def _convblock_kernel(x_ref, w_ref, gmask_ref, mask_ref, b_ref, gamma_ref,
                      beta_ref, o_ref, im2col_ref, *, width, cg):
    # x_ref:      (1, Cin, L)       bf16; L = (H+2)*W + 2 (H-padded, flattened, 1 guard zero each end)
    # w_ref:      (Cb, 9*Cin)       bf16 conv weights (tap-major, cin-minor columns)
    # gmask_ref:  (Cb, Cb)          f32 block-diagonal group-membership mask (identical per Cout block)
    # mask_ref:   (2, HW)           bf16 {0,1}; row0: col!=0, row1: col!=W-1
    # b/gamma/beta_ref: (Cb, 1)     f32
    # o_ref:      (1, Cb, HW)       f32 output block (lane-dense: HW in lanes)
    # im2col_ref: (9*Cin, HW)       bf16 VMEM scratch
    cin = x_ref.shape[1]
    hw = o_ref.shape[2]

    m = mask_ref[...]
    m_left = jnp.broadcast_to(m[0:1, :], (cin, hw))    # zero where output col j == 0
    m_right = jnp.broadcast_to(m[1:2, :], (cin, hw))   # zero where output col j == W-1

    # Build the (9*Cin, HW) im2col tile on-chip.  Tap (kh, kw) of the padded conv is a
    # static lane-shifted slice of the flattened H-padded input; the kw=0 / kw=2 taps
    # are masked where they would wrap across an image row (that is the W zero-padding).
    for kh in range(3):
        for kw in range(3):
            tap = kh * 3 + kw
            s = kh * width + kw
            xs = x_ref[0, :, s:s + hw]                 # (Cin, HW) bf16
            if kw == 0:
                xs = xs * m_left
            elif kw == 2:
                xs = xs * m_right
            im2col_ref[tap * cin:(tap + 1) * cin, :] = xs

    # --- 3x3 conv: ONE MXU matmul with K = 9*Cin, f32 accumulation ---
    y = jnp.dot(w_ref[...], im2col_ref[...],
                preferred_element_type=jnp.float32)    # (Cb, HW) f32
    yb = y + b_ref[...]                                # conv bias, broadcast over lanes

    # --- GroupNorm statistics in f32 (groups are contiguous channel blocks) ---
    gmask = gmask_ref[...]                             # (Cb, Cb) block-diagonal
    gsum = jnp.sum(jnp.dot(gmask, yb, preferred_element_type=jnp.float32),
                   axis=1, keepdims=True)              # (Cb, 1) group sums per channel
    gsq = jnp.sum(jnp.dot(gmask, yb * yb, preferred_element_type=jnp.float32),
                  axis=1, keepdims=True)               # (Cb, 1) group sum of squares
    inv_cnt = 1.0 / float(hw * cg)
    mean = gsum * inv_cnt
    var = jnp.maximum(gsq * inv_cnt - mean * mean, 0.0)
    rstd = jax.lax.rsqrt(var + EPS)

    # --- fused normalize + affine: one scale/shift pass over (Cb, HW) ---
    scale = rstd * gamma_ref[...]
    shift = beta_ref[...] - mean * scale
    yn = yb * scale + shift

    # --- Mish with a single exp:  x * (t^2-1)/(t^2+1),  t = 1 + exp(min(x, 20)) ---
    e = jnp.exp(jnp.minimum(yn, 20.0))
    t = 1.0 + e
    t2 = t * t
    mish = yn * (t2 - 1.0) * pl.reciprocal(t2 + 1.0, approx=True)
    out = jnp.where(yn > 20.0, yn, mish)

    o_ref[0] = out.astype(o_ref.dtype)                 # lane-dense (Cb, HW) store


@jax.jit
def conv_block_forward(x_nchw, w_kkio, b, gamma, beta):
    """PyTorch-equivalent ConvBlock forward. x_nchw: (N, Cin, H, W) -> (N, Cout, H, W)."""
    n, cin, h, w = x_nchw.shape
    cout = w_kkio.shape[-1]
    assert cout % GROUPS == 0
    cg = cout // GROUPS
    hw = h * w
    l = (h + 2) * w + 2

    # Layout glue only (cheap XLA ops, no 9x expansion): cast to bf16 (halves input
    # DMA), pad H by 1, flatten (H+2, W), add one guard zero at each end.
    xh = jnp.pad(x_nchw.astype(jnp.bfloat16), ((0, 0), (0, 0), (1, 1), (0, 0)))
    xflat = jnp.pad(xh.reshape(n, cin, (h + 2) * w), ((0, 0), (0, 0), (1, 1)))

    # Conv weights as a single (Cout, 9*Cin) bf16 matrix (tap-major, cin-minor columns).
    wmat = jnp.transpose(w_kkio.reshape(9 * cin, cout), (1, 0)).astype(jnp.bfloat16)

    # Second parallel grid axis over Cout halves (whole groups per block) -> both
    # v7x TensorCores get work even for N == 1; no-op on v5e/v6e.
    csplit = 2 if (GROUPS % 2 == 0 and (cout // 2) % 8 == 0) else 1
    cb = cout // csplit

    # Block-diagonal group-membership mask for one Cout block (identical per block).
    ch = jnp.arange(cb)
    gmask = (ch[:, None] // cg == ch[None, :] // cg).astype(jnp.float32)

    # Lane masks for the horizontal taps that would wrap across image rows.
    col = jnp.arange(hw) % w
    lane_masks = jnp.stack([col != 0, col != (w - 1)]).astype(jnp.bfloat16)

    b2 = b.reshape(cout, 1).astype(jnp.float32)
    g2 = gamma.reshape(cout, 1).astype(jnp.float32)
    be2 = beta.reshape(cout, 1).astype(jnp.float32)

    # Right-sized VMEM request: double-buffered blocks + im2col scratch + a handful of
    # (Cb, HW) f32 temporaries, with a generous margin (still only a few MiB here).
    block_bytes = (cin * l * 2 + cb * 9 * cin * 2 + cb * cb * 4 + 2 * hw * 2
                   + 3 * cb * 4 + cb * hw * 4)
    scratch_bytes = 9 * cin * hw * 2 + 8 * cb * hw * 4
    vmem_limit = int(min(64 * 1024 * 1024,
                         max(4 * 1024 * 1024, 4 * (2 * block_bytes + scratch_bytes))))

    kernel = functools.partial(_convblock_kernel, width=w, cg=cg)
    out = pl.pallas_call(
        kernel,
        out_shape=jax.ShapeDtypeStruct((n, cout, hw), jnp.float32),
        grid_spec=pltpu.PrefetchScalarGridSpec(
            num_scalar_prefetch=0,
            grid=(n, csplit),
            in_specs=[
                pl.BlockSpec((1, cin, l), lambda i, j: (i, 0, 0)),
                pl.BlockSpec((cb, 9 * cin), lambda i, j: (j, 0)),
                pl.BlockSpec((cb, cb), lambda i, j: (0, 0)),
                pl.BlockSpec((2, hw), lambda i, j: (0, 0)),
                pl.BlockSpec((cb, 1), lambda i, j: (j, 0)),
                pl.BlockSpec((cb, 1), lambda i, j: (j, 0)),
                pl.BlockSpec((cb, 1), lambda i, j: (j, 0)),
            ],
            out_specs=pl.BlockSpec((1, cb, hw), lambda i, j: (i, j, 0)),
            scratch_shapes=[pltpu.VMEM((9 * cin, hw), jnp.bfloat16)],
        ),
        compiler_params=pltpu.CompilerParams(
            dimension_semantics=("parallel", "parallel"),
            vmem_limit_bytes=vmem_limit),
    )(xflat, wmat, gmask, lane_masks, b2, g2, be2)

    # (N, Cout, HW) is already channel-major: un-flattening HW gives NCHW directly.
    return out.reshape(n, cout, h, w)


def _reference(x_nchw, w_kkio, b, gamma, beta):
    # Pure-JAX f32 reference replicating PyTorch semantics.
    w_oihw = jnp.transpose(w_kkio, (3, 2, 0, 1))
    y = jax.lax.conv_general_dilated(
        x_nchw, w_oihw, window_strides=(1, 1), padding=((1, 1), (1, 1)),
        dimension_numbers=('NCHW', 'OIHW', 'NCHW'))
    y = y + b[None, :, None, None]
    n, c, h, w = y.shape
    yg = y.reshape(n, GROUPS, c // GROUPS, h, w)
    m = yg.mean(axis=(2, 3, 4), keepdims=True)
    v = ((yg - m) ** 2).mean(axis=(2, 3, 4), keepdims=True)
    yn = ((yg - m) * jax.lax.rsqrt(v + EPS)).reshape(n, c, h, w)
    yn = yn * gamma[None, :, None, None] + beta[None, :, None, None]
    return yn * jnp.tanh(jax.nn.softplus(yn))


if __name__ == "__main__":
    key = jax.random.PRNGKey(0)
    k_x, k_w, k_b, k_g, k_be = jax.random.split(key, 5)

    N, CIN, COUT, H, W = 2, 4, 32, 16, 16     # out_channels divisible by 8 groups

    x = jax.random.normal(k_x, (N, CIN, H, W), dtype=jnp.float32)
    fan_in = 9 * CIN
    w_kkio = jax.random.uniform(k_w, (3, 3, CIN, COUT), dtype=jnp.float32,
                                minval=-1.0, maxval=1.0) / np.sqrt(fan_in)
    b = jax.random.uniform(k_b, (COUT,), dtype=jnp.float32,
                           minval=-1.0, maxval=1.0) / np.sqrt(fan_in)
    gamma = 1.0 + 0.1 * jax.random.normal(k_g, (COUT,), dtype=jnp.float32)
    beta = 0.1 * jax.random.normal(k_be, (COUT,), dtype=jnp.float32)

    out = conv_block_forward(x, w_kkio, b, gamma, beta)
    out = jax.block_until_ready(out)

    ref = jax.block_until_ready(_reference(x, w_kkio, b, gamma, beta))
    assert out.shape == (N, COUT, H, W)
    # Tolerance accounts for bf16 MXU operands (f32 accumulation) and the approx EUP
    # reciprocal in the Mish rewrite.
    np.testing.assert_allclose(np.asarray(out), np.asarray(ref),
                               rtol=3e-2, atol=3e-2)

    print("KERNEL_OK")
</pallas_src>

<mosaic_0001>
module attributes {stable_mosaic.version = 11 : i64} {
  func.func @_convblock_kernel(%arg0: i32, %arg1: i32, %arg2: memref<1x4x290xbf16, #tpu.memory_space<vmem>>, %arg3: memref<16x36xbf16, #tpu.memory_space<vmem>>, %arg4: memref<16x16xf32, #tpu.memory_space<vmem>>, %arg5: memref<2x256xbf16, #tpu.memory_space<vmem>>, %arg6: memref<16x1xf32, #tpu.memory_space<vmem>>, %arg7: memref<16x1xf32, #tpu.memory_space<vmem>>, %arg8: memref<16x1xf32, #tpu.memory_space<vmem>>, %arg9: memref<1x16x256xf32, #tpu.memory_space<vmem>>, %arg10: memref<36x256xbf16, #tpu.memory_space<vmem>>) attributes {dimension_semantics = [#tpu.dimension_semantics<parallel>, #tpu.dimension_semantics<parallel>], iteration_bounds = array<i64: 2, 2>, scalar_prefetch = 0 : i64, scratch_operands = 1 : i64, tpu.core_type = #tpu.core_type<tc>, window_params = [{transform_indices = @transform_0, window_bounds = array<i64: 1, 4, 290>}, {transform_indices = @transform_1, window_bounds = array<i64: 16, 36>}, {pipeline_mode = #tpu.pipeline_mode<synchronous>, transform_indices = @transform_2, window_bounds = array<i64: 16, 16>}, {pipeline_mode = #tpu.pipeline_mode<synchronous>, transform_indices = @transform_3, window_bounds = array<i64: 2, 256>}, {transform_indices = @transform_4, window_bounds = array<i64: 16, 1>}, {transform_indices = @transform_5, window_bounds = array<i64: 16, 1>}, {transform_indices = @transform_6, window_bounds = array<i64: 16, 1>}, {transform_indices = @transform_7, window_bounds = array<i64: 1, 16, 256>}]} {
    %c0 = arith.constant 0 : index
    %c0_0 = arith.constant 0 : index
    %0 = vector.load %arg5[%c0, %c0_0] : memref<2x256xbf16, #tpu.memory_space<vmem>>, vector<2x256xbf16>
    %1 = vector.extract_strided_slice %0 {offsets = [0, 0], sizes = [1, 256], strides = [1, 1]} : vector<2x256xbf16> to vector<1x256xbf16>
    %2 = vector.shape_cast %1 : vector<1x256xbf16> to vector<1x256xbf16>
    %3 = vector.broadcast %2 : vector<1x256xbf16> to vector<4x256xbf16>
    %4 = vector.extract_strided_slice %0 {offsets = [1, 0], sizes = [1, 256], strides = [1, 1]} : vector<2x256xbf16> to vector<1x256xbf16>
    %5 = vector.shape_cast %4 : vector<1x256xbf16> to vector<1x256xbf16>
    %6 = vector.broadcast %5 : vector<1x256xbf16> to vector<4x256xbf16>
    %c0_1 = arith.constant 0 : index
    %c0_2 = arith.constant 0 : index
    %c0_3 = arith.constant 0 : index
    %7 = vector.load %arg2[%c0_1, %c0_2, %c0_3] : memref<1x4x290xbf16, #tpu.memory_space<vmem>>, vector<1x4x256xbf16>
    %8 = vector.shape_cast %7 : vector<1x4x256xbf16> to vector<4x256xbf16>
    %9 = arith.mulf %8, %3 : vector<4x256xbf16>
    %c0_4 = arith.constant 0 : index
    %c0_5 = arith.constant 0 : index
    %10 = vector.load %arg10[%c0_4, %c0_5] : memref<36x256xbf16, #tpu.memory_space<vmem>>, vector<4x256xbf16>
    tpu.vector_store %arg10[%c0_4, %c0_5], %9 {strides = array<i32>} : memref<36x256xbf16, #tpu.memory_space<vmem>>, vector<4x256xbf16>,
    %c0_6 = arith.constant 0 : index
    %c0_7 = arith.constant 0 : index
    %c1 = arith.constant 1 : index
    %11 = vector.load %arg2[%c0_6, %c0_7, %c1] : memref<1x4x290xbf16, #tpu.memory_space<vmem>>, vector<1x4x256xbf16>
    %12 = vector.shape_cast %11 : vector<1x4x256xbf16> to vector<4x256xbf16>
    %c4 = arith.constant 4 : index
    %c0_8 = arith.constant 0 : index
    %13 = vector.load %arg10[%c4, %c0_8] : memref<36x256xbf16, #tpu.memory_space<vmem>>, vector<4x256xbf16>
    tpu.vector_store %arg10[%c4, %c0_8], %12 {strides = array<i32>} : memref<36x256xbf16, #tpu.memory_space<vmem>>, vector<4x256xbf16>,
    %c0_9 = arith.constant 0 : index
    %c0_10 = arith.constant 0 : index
    %c2 = arith.constant 2 : index
    %14 = vector.load %arg2[%c0_9, %c0_10, %c2] : memref<1x4x290xbf16, #tpu.memory_space<vmem>>, vector<1x4x256xbf16>
    %15 = vector.shape_cast %14 : vector<1x4x256xbf16> to vector<4x256xbf16>
    %16 = arith.mulf %15, %6 : vector<4x256xbf16>
    %c8 = arith.constant 8 : index
    %c0_11 = arith.constant 0 : index
    %17 = vector.load %arg10[%c8, %c0_11] : memref<36x256xbf16, #tpu.memory_space<vmem>>, vector<4x256xbf16>
    tpu.vector_store %arg10[%c8, %c0_11], %16 {strides = array<i32>} : memref<36x256xbf16, #tpu.memory_space<vmem>>, vector<4x256xbf16>,
    %c0_12 = arith.constant 0 : index
    %c0_13 = arith.constant 0 : index
    %c16 = arith.constant 16 : index
    %18 = vector.load %arg2[%c0_12, %c0_13, %c16] : memref<1x4x290xbf16, #tpu.memory_space<vmem>>, vector<1x4x256xbf16>
    %19 = vector.shape_cast %18 : vector<1x4x256xbf16> to vector<4x256xbf16>
    %20 = arith.mulf %19, %3 : vector<4x256xbf16>
    %c12 = arith.constant 12 : index
    %c0_14 = arith.constant 0 : index
    %21 = vector.load %arg10[%c12, %c0_14] : memref<36x256xbf16, #tpu.memory_space<vmem>>, vector<4x256xbf16>
    tpu.vector_store %arg10[%c12, %c0_14], %20 {strides = array<i32>} : memref<36x256xbf16, #tpu.memory_space<vmem>>, vector<4x256xbf16>,
    %c0_15 = arith.constant 0 : index
    %c0_16 = arith.constant 0 : index
    %c17 = arith.constant 17 : index
    %22 = vector.load %arg2[%c0_15, %c0_16, %c17] : memref<1x4x290xbf16, #tpu.memory_space<vmem>>, vector<1x4x256xbf16>
    %23 = vector.shape_cast %22 : vector<1x4x256xbf16> to vector<4x256xbf16>
    %c16_17 = arith.constant 16 : index
    %c0_18 = arith.constant 0 : index
    %24 = vector.load %arg10[%c16_17, %c0_18] : memref<36x256xbf16, #tpu.memory_space<vmem>>, vector<4x256xbf16>
    tpu.vector_store %arg10[%c16_17, %c0_18], %23 {strides = array<i32>} : memref<36x256xbf16, #tpu.memory_space<vmem>>, vector<4x256xbf16>,
    %c0_19 = arith.constant 0 : index
    %c0_20 = arith.constant 0 : index
    %c18 = arith.constant 18 : index
    %25 = vector.load %arg2[%c0_19, %c0_20, %c18] : memref<1x4x290xbf16, #tpu.memory_space<vmem>>, vector<1x4x256xbf16>
    %26 = vector.shape_cast %25 : vector<1x4x256xbf16> to vector<4x256xbf16>
    %27 = arith.mulf %26, %6 : vector<4x256xbf16>
    %c20 = arith.constant 20 : index
    %c0_21 = arith.constant 0 : index
    %28 = vector.load %arg10[%c20, %c0_21] : memref<36x256xbf16, #tpu.memory_space<vmem>>, vector<4x256xbf16>
    tpu.vector_store %arg10[%c20, %c0_21], %27 {strides = array<i32>} : memref<36x256xbf16, #tpu.memory_space<vmem>>, vector<4x256xbf16>,
    %c0_22 = arith.constant 0 : index
    %c0_23 = arith.constant 0 : index
    %c32 = arith.constant 32 : index
    %29 = vector.load %arg2[%c0_22, %c0_23, %c32] : memref<1x4x290xbf16, #tpu.memory_space<vmem>>, vector<1x4x256xbf16>
    %30 = vector.shape_cast %29 : vector<1x4x256xbf16> to vector<4x256xbf16>
    %31 = arith.mulf %30, %3 : vector<4x256xbf16>
    %c24 = arith.constant 24 : index
    %c0_24 = arith.constant 0 : index
    %32 = vector.load %arg10[%c24, %c0_24] : memref<36x256xbf16, #tpu.memory_space<vmem>>, vector<4x256xbf16>
    tpu.vector_store %arg10[%c24, %c0_24], %31 {strides = array<i32>} : memref<36x256xbf16, #tpu.memory_space<vmem>>, vector<4x256xbf16>,
    %c0_25 = arith.constant 0 : index
    %c0_26 = arith.constant 0 : index
    %c33 = arith.constant 33 : index
    %33 = vector.load %arg2[%c0_25, %c0_26, %c33] : memref<1x4x290xbf16, #tpu.memory_space<vmem>>, vector<1x4x256xbf16>
    %34 = vector.shape_cast %33 : vector<1x4x256xbf16> to vector<4x256xbf16>
    %c28 = arith.constant 28 : index
    %c0_27 = arith.constant 0 : index
    %35 = vector.load %arg10[%c28, %c0_27] : memref<36x256xbf16, #tpu.memory_space<vmem>>, vector<4x256xbf16>
    tpu.vector_store %arg10[%c28, %c0_27], %34 {strides = array<i32>} : memref<36x256xbf16, #tpu.memory_space<vmem>>, vector<4x256xbf16>,
    %c0_28 = arith.constant 0 : index
    %c0_29 = arith.constant 0 : index
    %c34 = arith.constant 34 : index
    %36 = vector.load %arg2[%c0_28, %c0_29, %c34] : memref<1x4x290xbf16, #tpu.memory_space<vmem>>, vector<1x4x256xbf16>
    %37 = vector.shape_cast %36 : vector<1x4x256xbf16> to vector<4x256xbf16>
    %38 = arith.mulf %37, %6 : vector<4x256xbf16>
    %c32_30 = arith.constant 32 : index
    %c0_31 = arith.constant 0 : index
    %39 = vector.load %arg10[%c32_30, %c0_31] : memref<36x256xbf16, #tpu.memory_space<vmem>>, vector<4x256xbf16>
    tpu.vector_store %arg10[%c32_30, %c0_31], %38 {strides = array<i32>} : memref<36x256xbf16, #tpu.memory_space<vmem>>, vector<4x256xbf16>,
    %c0_32 = arith.constant 0 : index
    %c0_33 = arith.constant 0 : index
    %40 = vector.load %arg3[%c0_32, %c0_33] : memref<16x36xbf16, #tpu.memory_space<vmem>>, vector<16x36xbf16>
    %c0_34 = arith.constant 0 : index
    %c0_35 = arith.constant 0 : index
    %41 = vector.load %arg10[%c0_34, %c0_35] : memref<36x256xbf16, #tpu.memory_space<vmem>>, vector<36x256xbf16>
    %cst = arith.constant dense<0.000000e+00> : vector<16x256xf32>
    %42 = tpu.matmul %40, %41, %cst {dimension_numbers = #tpu.dot_dimension_numbers<[1], [0], [0], [1], [0, 0, 1, 1], [], []>} : vector<16x36xbf16>, vector<36x256xbf16>, vector<16x256xf32> -> vector<16x256xf32>
    %c0_36 = arith.constant 0 : index
    %c0_37 = arith.constant 0 : index
    %43 = vector.load %arg6[%c0_36, %c0_37] : memref<16x1xf32, #tpu.memory_space<vmem>>, vector<16x1xf32>
    %44 = vector.broadcast %43 : vector<16x1xf32> to vector<16x256xf32>
    %45 = arith.addf %42, %44 : vector<16x256xf32>
    %c0_38 = arith.constant 0 : index
    %c0_39 = arith.constant 0 : index
    %46 = vector.load %arg4[%c0_38, %c0_39] : memref<16x16xf32, #tpu.memory_space<vmem>>, vector<16x16xf32>
    %cst_40 = arith.constant dense<0.000000e+00> : vector<16x256xf32>
    %47 = tpu.matmul %46, %45, %cst_40 {dimension_numbers = #tpu.dot_dimension_numbers<[1], [0], [0], [1], [0, 0, 1, 1], [], []>} : vector<16x16xf32>, vector<16x256xf32>, vector<16x256xf32> -> vector<16x256xf32>
    %cst_41 = arith.constant dense<0.000000e+00> : vector<16xf32>
    %48 = vector.multi_reduction <add>, %47, %cst_41 [1] : vector<16x256xf32> to vector<16xf32>
    %49 = vector.shape_cast %48 : vector<16xf32> to vector<16x1xf32>
    %50 = arith.mulf %45, %45 : vector<16x256xf32>
    %cst_42 = arith.constant dense<0.000000e+00> : vector<16x256xf32>
    %51 = tpu.matmul %46, %50, %cst_42 {dimension_numbers = #tpu.dot_dimension_numbers<[1], [0], [0], [1], [0, 0, 1, 1], [], []>} : vector<16x16xf32>, vector<16x256xf32>, vector<16x256xf32> -> vector<16x256xf32>
    %cst_43 = arith.constant dense<0.000000e+00> : vector<16xf32>
    %52 = vector.multi_reduction <add>, %51, %cst_43 [1] : vector<16x256xf32> to vector<16xf32>
    %53 = vector.shape_cast %52 : vector<16xf32> to vector<16x1xf32>
    %cst_44 = arith.constant 9.765625E-4 : f32
    %54 = vector.broadcast %cst_44 : f32 to vector<16x1xf32>
    %55 = arith.mulf %49, %54 : vector<16x1xf32>
    %cst_45 = arith.constant 9.765625E-4 : f32
    %56 = vector.broadcast %cst_45 : f32 to vector<16x1xf32>
    %57 = arith.mulf %53, %56 : vector<16x1xf32>
    %58 = arith.mulf %55, %55 : vector<16x1xf32>
    %59 = arith.subf %57, %58 : vector<16x1xf32>
    %cst_46 = arith.constant 0.000000e+00 : f32
    %60 = vector.broadcast %cst_46 : f32 to vector<16x1xf32>
    %61 = arith.maximumf %59, %60 : vector<16x1xf32>
    %cst_47 = arith.constant 9.99999974E-6 : f32
    %62 = vector.broadcast %cst_47 : f32 to vector<16x1xf32>
    %63 = arith.addf %61, %62 : vector<16x1xf32>
    %64 = math.rsqrt %63 : vector<16x1xf32>
    %c0_48 = arith.constant 0 : index
    %c0_49 = arith.constant 0 : index
    %65 = vector.load %arg7[%c0_48, %c0_49] : memref<16x1xf32, #tpu.memory_space<vmem>>, vector<16x1xf32>
    %66 = arith.mulf %64, %65 : vector<16x1xf32>
    %c0_50 = arith.constant 0 : index
    %c0_51 = arith.constant 0 : index
    %67 = vector.load %arg8[%c0_50, %c0_51] : memref<16x1xf32, #tpu.memory_space<vmem>>, vector<16x1xf32>
    %68 = arith.mulf %55, %66 : vector<16x1xf32>
    %69 = arith.subf %67, %68 : vector<16x1xf32>
    %70 = vector.broadcast %66 : vector<16x1xf32> to vector<16x256xf32>
    %71 = arith.mulf %45, %70 : vector<16x256xf32>
    %72 = vector.broadcast %69 : vector<16x1xf32> to vector<16x256xf32>
    %73 = arith.addf %71, %72 : vector<16x256xf32>
    %cst_52 = arith.constant 2.000000e+01 : f32
    %74 = vector.broadcast %cst_52 : f32 to vector<16x256xf32>
    %75 = arith.minimumf %73, %74 : vector<16x256xf32>
    %76 = math.exp %75 : vector<16x256xf32>
    %cst_53 = arith.constant 1.000000e+00 : f32
    %77 = vector.broadcast %cst_53 : f32 to vector<16x256xf32>
    %78 = arith.addf %77, %76 : vector<16x256xf32>
    %79 = arith.mulf %78, %78 : vector<16x256xf32>
    %cst_54 = arith.constant 1.000000e+00 : f32
    %80 = vector.broadcast %cst_54 : f32 to vector<16x256xf32>
    %81 = arith.subf %79, %80 : vector<16x256xf32>
    %82 = arith.mulf %73, %81 : vector<16x256xf32>
    %cst_55 = arith.constant 1.000000e+00 : f32
    %83 = vector.broadcast %cst_55 : f32 to vector<16x256xf32>
    %84 = arith.addf %79, %83 : vector<16x256xf32>
    %85 = tpu.reciprocal %84 {approx = true} : vector<16x256xf32> -> vector<16x256xf32>
    %86 = arith.mulf %82, %85 : vector<16x256xf32>
    %cst_56 = arith.constant 2.000000e+01 : f32
    %87 = vector.broadcast %cst_56 : f32 to vector<16x256xf32>
    %88 = arith.cmpf ogt, %73, %87 : vector<16x256xf32>
    %89 = arith.select %88, %73, %86 : vector<16x256xi1>, vector<16x256xf32>
    %c0_57 = arith.constant 0 : index
    %c0_58 = arith.constant 0 : index
    %c0_59 = arith.constant 0 : index
    %90 = vector.load %arg9[%c0_57, %c0_58, %c0_59] : memref<1x16x256xf32, #tpu.memory_space<vmem>>, vector<1x16x256xf32>
    %91 = vector.shape_cast %90 : vector<1x16x256xf32> to vector<16x256xf32>
    %92 = vector.shape_cast %89 : vector<16x256xf32> to vector<1x16x256xf32>
    tpu.vector_store %arg9[%c0_57, %c0_58, %c0_59], %92 {strides = array<i32>} : memref<1x16x256xf32, #tpu.memory_space<vmem>>, vector<1x16x256xf32>,
    return
  }
  func.func @transform_0(%arg0: i32, %arg1: i32) -> (i32, i32, i32) {
    %c0_i32 = arith.constant 0 : i32
    %c0_i32_0 = arith.constant 0 : i32
    %c0_i32_1 = arith.constant 0 : i32
    return %arg0, %c0_i32, %c0_i32_0 : i32, i32, i32
  }
  func.func @transform_1(%arg0: i32, %arg1: i32) -> (i32, i32) {
    %c0_i32 = arith.constant 0 : i32
    %c0_i32_0 = arith.constant 0 : i32
    return %arg1, %c0_i32 : i32, i32
  }
  func.func @transform_2(%arg0: i32, %arg1: i32) -> (i32, i32) {
    %c0_i32 = arith.constant 0 : i32
    %c0_i32_0 = arith.constant 0 : i32
    %c0_i32_1 = arith.constant 0 : i32
    return %c0_i32, %c0_i32_0 : i32, i32
  }
  func.func @transform_3(%arg0: i32, %arg1: i32) -> (i32, i32) {
    %c0_i32 = arith.constant 0 : i32
    %c0_i32_0 = arith.constant 0 : i32
    %c0_i32_1 = arith.constant 0 : i32
    return %c0_i32, %c0_i32_0 : i32, i32
  }
  func.func @transform_4(%arg0: i32, %arg1: i32) -> (i32, i32) {
    %c0_i32 = arith.constant 0 : i32
    %c0_i32_0 = arith.constant 0 : i32
    return %arg1, %c0_i32 : i32, i32
  }
  func.func @transform_5(%arg0: i32, %arg1: i32) -> (i32, i32) {
    %c0_i32 = arith.constant 0 : i32
    %c0_i32_0 = arith.constant 0 : i32
    return %arg1, %c0_i32 : i32, i32
  }
  func.func @transform_6(%arg0: i32, %arg1: i32) -> (i32, i32) {
    %c0_i32 = arith.constant 0 : i32
    %c0_i32_0 = arith.constant 0 : i32
    return %arg1, %c0_i32 : i32, i32
  }
  func.func @transform_7(%arg0: i32, %arg1: i32) -> (i32, i32, i32) {
    %c0_i32 = arith.constant 0 : i32
    %c0_i32_0 = arith.constant 0 : i32
    return %arg0, %arg1, %c0_i32 : i32, i32, i32
  }
}

</mosaic_0001>

<llo_original>
// kernel: conv_block_forward.1
$region0: #{conv_block_forward.1}
  #allocation0 [shape = 'u32[]', space=smem, size = 0x4, offset = 0x4, fixed_abs, tag = 'smem constant byte address 0x4 - core index']
  #allocation1 [shape = 'u32[72,128]{1,0:T(1,128)}', space=vmem, size = 0x9000, scoped, tag = 'internal scratch']
  #allocation2 [shape = 'bf16[36,256]{1,0:T(8,128)(2,1)}', space=vmem, size = 0x5000, scoped, tag = 'scratch operand']
  %s0 = inlined_call_operand.vmem [shape: bf16[2,4,290], index: 0, kind: input, shape index: {}]
  %s1 = inlined_call_operand.vmem [shape: bf16[32,36], index: 1, kind: input, shape index: {}]
  %s2 = inlined_call_operand.vmem [shape: f32[16,16], index: 2, kind: input, shape index: {}]
  %s3 = inlined_call_operand.vmem [shape: bf16[2,256], index: 3, kind: input, shape index: {}]
  %s4 = inlined_call_operand.vmem [shape: f32[32,1], index: 4, kind: input, shape index: {}]
  %s5 = inlined_call_operand.vmem [shape: f32[32,1], index: 5, kind: input, shape index: {}]
  %s6 = inlined_call_operand.vmem [shape: f32[32,1], index: 6, kind: input, shape index: {}]
  %s7 = inlined_call_operand.vmem [shape: f32[2,32,256], index: 7, kind: output, shape index: {}]
  %s8 = sld [smem:[#allocation0]]
  $region61: #{conv_block_forward.1} parent=0
    _
  %s10 = ssub.s32 1, %s8
  %s11 = scalar_select 0, %s10, %s8
  loop: start=0, step=1, limit=6
  $region2: #{conv_block_forward.1} parent=0 // loop_pre_header
    _
  $region3: #{conv_block_forward.1} parent=0 // loop_header
    %s13 = sphi 0, %s17
    %p14 = scmp.ge.s32.totalorder %s13, 6
    %s20 = sphi 0, %s32
    %s21 = sphi 0, %s28
    %s22 = sphi 0, %s20
    %s23 = sphi 0, %s21
    %s24 = sphi 0, %s22
    %s25 = sphi 0, %s23
    %s35 = sphi 0, %s37
    %s38 = sphi 0, %s35
    %s39 = sphi 0, %s38
    %s55 = sphi 0, %s39
    %s61 = sphi 0, %s63
    %s64 = sphi 0, %s61
    %s65 = sphi 0, %s64
    %s81 = sphi 0, %s65
    %s85 = sphi 0, %s85
    %s87 = sphi 0, %s85
    %s88 = sphi 0, %s87
    %s102 = sphi 0, %s88
    %s106 = sphi 0, %s106
    %s108 = sphi 0, %s106
    %s109 = sphi 0, %s108
    %s123 = sphi 0, %s109
    %s129 = sphi 0, %s131
    %s132 = sphi 0, %s129
    %s133 = sphi 0, %s132
    %s149 = sphi 0, %s133
    %s155 = sphi 0, %s157
    %s158 = sphi 0, %s155
    %s159 = sphi 0, %s158
    %s175 = sphi 0, %s159
    %s181 = sphi 0, %s183
    %s184 = sphi 0, %s181
    %s185 = sphi 0, %s184
    %s201 = sphi 0, %s185
    %s209 = sphi 0, %s211
    %s212 = sphi 0, %s209
    %s213 = sphi 0, %s212
    %s229 = sphi 0, %s213
  $region4: #{conv_block_forward.1} parent=0 // loop_header_branch
    %16 = sbr.rel (%p14) target = $region8
  $region5: #{conv_block_forward.1} parent=0 // loop_body
    %s18 = ssub.s32 %s13, 1
    %s19 = ssub.s32 %s13, 2
    %s26 = sadd.s32 1, %s21
    %p27 = scmp.ge.s32.totalorder %s26, 2
    %s28 = scalar_select %p27, 0, %s26
    %s29 = sadd.s32 1, %s20
    %s30 = scalar_select %p27, %s29, %s20
    %p31 = scmp.ge.s32.totalorder %s30, 2
    %s32 = scalar_select %p31, 0, %s30
    %s33 = ssub.s32 %s20, %s32
    %p34 = scmp.eq.s32.totalorder %s33, 0
    %s36 = sadd.s32 %s35, 1
    %s37 = scalar_select %p34, %s35, %s36
    %p40 = pneg %p34
    %p41 = scmp.eq.s32.totalorder %s13, 3
    %p42 = por %p40, %p41
    %p43 = scmp.ne.s32.totalorder %s35, %s38
    %p44 = scmp.eq.s32.totalorder %s13, 0
    %p45 = por %p43, %p44
    %p46 = scmp.ne.s32.totalorder %s35, %s38
    %p47 = scmp.eq.s32.totalorder %s18, 3
    %p48 = por %p46, %p47
    %p49 = scmp.ne.s32.totalorder %s38, %s39
    %p50 = scmp.eq.s32.totalorder %s18, 0
    %p51 = por %p49, %p50
    %p52 = scmp.ne.s32.totalorder %s38, %s39
    %p53 = scmp.eq.s32.totalorder %s19, 3
    %p54 = por %p52, %p53
    %p56 = scmp.ne.s32.totalorder %s39, %s55
    %p57 = scmp.eq.s32.totalorder %s19, 0
    %p58 = por %p56, %p57
    %s59 = ssub.s32 %s21, %s28
    %p60 = scmp.eq.s32.totalorder %s59, 0
    %s62 = sadd.s32 %s61, 1
    %s63 = scalar_select %p60, %s61, %s62
    %p66 = pneg %p60
    %p67 = scmp.eq.s32.totalorder %s13, 3
    %p68 = por %p66, %p67
    %p69 = scmp.ne.s32.totalorder %s61, %s64
    %p70 = scmp.eq.s32.totalorder %s13, 0
    %p71 = por %p69, %p70
    %p72 = scmp.ne.s32.totalorder %s61, %s64
    %p73 = scmp.eq.s32.totalorder %s18, 3
    %p74 = por %p72, %p73
    %p75 = scmp.ne.s32.totalorder %s64, %s65
    %p76 = scmp.eq.s32.totalorder %s18, 0
    %p77 = por %p75, %p76
    %p78 = scmp.ne.s32.totalorder %s64, %s65
    %p79 = scmp.eq.s32.totalorder %s19, 3
    %p80 = por %p78, %p79
    %p82 = scmp.ne.s32.totalorder %s65, %s81
    %p83 = scmp.eq.s32.totalorder %s19, 0
    %p84 = por %p82, %p83
    %s86 = sadd.s32 %s85, 1
    %p89 = scmp.eq.s32.totalorder %s13, 3
    %p90 = scmp.ne.s32.totalorder %s85, %s87
    %p91 = scmp.eq.s32.totalorder %s13, 0
    %p92 = por %p90, %p91
    %p93 = scmp.ne.s32.totalorder %s85, %s87
    %p94 = scmp.eq.s32.totalorder %s18, 3
    %p95 = por %p93, %p94
    %p96 = scmp.ne.s32.totalorder %s87, %s88
    %p97 = scmp.eq.s32.totalorder %s18, 0
    %p98 = por %p96, %p97
    %p99 = scmp.ne.s32.totalorder %s87, %s88
    %p100 = scmp.eq.s32.totalorder %s19, 3
    %p101 = por %p99, %p100
    %p103 = scmp.ne.s32.totalorder %s88, %s102
    %p104 = scmp.eq.s32.totalorder %s19, 0
    %p105 = por %p103, %p104
    %s107 = sadd.s32 %s106, 1
    %p110 = scmp.eq.s32.totalorder %s13, 3
    %p111 = scmp.ne.s32.totalorder %s106, %s108
    %p112 = scmp.eq.s32.totalorder %s13, 0
    %p113 = por %p111, %p112
    %p114 = scmp.ne.s32.totalorder %s106, %s108
    %p115 = scmp.eq.s32.totalorder %s18, 3
    %p116 = por %p114, %p115
    %p117 = scmp.ne.s32.totalorder %s108, %s109
    %p118 = scmp.eq.s32.totalorder %s18, 0
    %p119 = por %p117, %p118
    %p120 = scmp.ne.s32.totalorder %s108, %s109
    %p121 = scmp.eq.s32.totalorder %s19, 3
    %p122 = por %p120, %p121
    %p124 = scmp.ne.s32.totalorder %s109, %s123
    %p125 = scmp.eq.s32.totalorder %s19, 0
    %p126 = por %p124, %p125
    %s127 = ssub.s32 %s21, %s28
    %p128 = scmp.eq.s32.totalorder %s127, 0
    %s130 = sadd.s32 %s129, 1
    %s131 = scalar_select %p128, %s129, %s130
    %p134 = pneg %p128
    %p135 = scmp.eq.s32.totalorder %s13, 3
    %p136 = por %p134, %p135
    %p137 = scmp.ne.s32.totalorder %s129, %s132
    %p138 = scmp.eq.s32.totalorder %s13, 0
    %p139 = por %p137, %p138
    %p140 = scmp.ne.s32.totalorder %s129, %s132
    %p141 = scmp.eq.s32.totalorder %s18, 3
    %p142 = por %p140, %p141
    %p143 = scmp.ne.s32.totalorder %s132, %s133
    %p144 = scmp.eq.s32.totalorder %s18, 0
    %p145 = por %p143, %p144
    %p146 = scmp.ne.s32.totalorder %s132, %s133
    %p147 = scmp.eq.s32.totalorder %s19, 3
    %p148 = por %p146, %p147
    %p150 = scmp.ne.s32.totalorder %s133, %s149
    %p151 = scmp.eq.s32.totalorder %s19, 0
    %p152 = por %p150, %p151
    %s153 = ssub.s32 %s21, %s28
    %p154 = scmp.eq.s32.totalorder %s153, 0
    %s156 = sadd.s32 %s155, 1
    %s157 = scalar_select %p154, %s155, %s156
    %p160 = pneg %p154
    %p161 = scmp.eq.s32.totalorder %s13, 3
    %p162 = por %p160, %p161
    %p163 = scmp.ne.s32.totalorder %s155, %s158
    %p164 = scmp.eq.s32.totalorder %s13, 0
    %p165 = por %p163, %p164
    %p166 = scmp.ne.s32.totalorder %s155, %s158
    %p167 = scmp.eq.s32.totalorder %s18, 3
    %p168 = por %p166, %p167
    %p169 = scmp.ne.s32.totalorder %s158, %s159
    %p170 = scmp.eq.s32.totalorder %s18, 0
    %p171 = por %p169, %p170
    %p172 = scmp.ne.s32.totalorder %s158, %s159
    %p173 = scmp.eq.s32.totalorder %s19, 3
    %p174 = por %p172, %p173
    %p176 = scmp.ne.s32.totalorder %s159, %s175
    %p177 = scmp.eq.s32.totalorder %s19, 0
    %p178 = por %p176, %p177
    %s179 = ssub.s32 %s21, %s28
    %p180 = scmp.eq.s32.totalorder %s179, 0
    %s182 = sadd.s32 %s181, 1
    %s183 = scalar_select %p180, %s181, %s182
    %p186 = pneg %p180
    %p187 = scmp.eq.s32.totalorder %s13, 3
    %p188 = por %p186, %p187
    %p189 = scmp.ne.s32.totalorder %s181, %s184
    %p190 = scmp.eq.s32.totalorder %s13, 0
    %p191 = por %p189, %p190
    %p192 = scmp.ne.s32.totalorder %s181, %s184
    %p193 = scmp.eq.s32.totalorder %s18, 3
    %p194 = por %p192, %p193
    %p195 = scmp.ne.s32.totalorder %s184, %s185
    %p196 = scmp.eq.s32.totalorder %s18, 0
    %p197 = por %p195, %p196
    %p198 = scmp.ne.s32.totalorder %s184, %s185
    %p199 = scmp.eq.s32.totalorder %s19, 3
    %p200 = por %p198, %p199
    %p202 = scmp.ne.s32.totalorder %s185, %s201
    %p203 = scmp.eq.s32.totalorder %s19, 0
    %p204 = por %p202, %p203
    %s205 = ssub.s32 %s20, %s32
    %s206 = ssub.s32 %s21, %s28
    %s207 = sor.u32 %s205, %s206
    %p208 = scmp.eq.s32.totalorder %s207, 0
    %s210 = sadd.s32 %s209, 1
    %s211 = scalar_select %p208, %s209, %s210
    %p214 = pneg %p208
    %p215 = scmp.eq.s32.totalorder %s13, 3
    %p216 = por %p214, %p215
    %p217 = scmp.ne.s32.totalorder %s209, %s212
    %p218 = scmp.eq.s32.totalorder %s13, 0
    %p219 = por %p217, %p218
    %p220 = scmp.ne.s32.totalorder %s209, %s212
    %p221 = scmp.eq.s32.totalorder %s18, 3
    %p222 = por %p220, %p221
    %p223 = scmp.ne.s32.totalorder %s212, %s213
    %p224 = scmp.eq.s32.totalorder %s18, 0
    %p225 = por %p223, %p224
    %p226 = scmp.ne.s32.totalorder %s212, %s213
    %p227 = scmp.eq.s32.totalorder %s19, 3
    %p228 = por %p226, %p227
    %p230 = scmp.ne.s32.totalorder %s213, %s229
    %p231 = scmp.eq.s32.totalorder %s19, 0
    %p232 = por %p230, %p231
    %p233 = scmp.le.s32.totalorder 1, %s13
    %p234 = scmp.lt.s32.totalorder %s13, 5
    %p235 = pnand %p233, %p234
    %p236 = pneg %p235
    // Predicated region
    $region9: #{conv_block_forward.1} parent=5 // pred_check
      _
    $region10: #{conv_block_forward.1} parent=5 // pred_check_branch
      %238 = sbr.rel (%p235) target = $region12
    $region11: #{conv_block_forward.1} parent=5 // pred_region
      %s239 = ssub.s32 %s13, 1
      // Predicated region
      $region13: #{conv_block_forward.1} parent=11 // pred_check
        %p240 = pneg %p98
      $region14: #{conv_block_forward.1} parent=11 // pred_check_branch
        %242 = sbr.rel (%p240) target = $region16
      $region15: #{conv_block_forward.1} parent=11 // pred_region
        _
      $region16: #{conv_block_forward.1} parent=11 // pred_fallthru
        _
      // Predicated region
      $region17: #{conv_block_forward.1} parent=11 // pred_check
        %p243 = pneg %p119
      $region18: #{conv_block_forward.1} parent=11 // pred_check_branch
        %245 = sbr.rel (%p243) target = $region20
      $region19: #{conv_block_forward.1} parent=11 // pred_region
        _
      $region20: #{conv_block_forward.1} parent=11 // pred_fallthru
        _
    $region12: #{conv_block_forward.1} parent=5 // pred_fallthru
      _
    %p246 = scmp.lt.s32.totalorder %s13, 4
    // Predicated region
    $region21: #{conv_block_forward.1} parent=5 // pred_check
      %p247 = pneg %p246
    $region22: #{conv_block_forward.1} parent=5 // pred_check_branch
      %249 = sbr.rel (%p247) target = $region24
    $region23: #{conv_block_forward.1} parent=5 // pred_region
      // Predicated region
      $region25: #{conv_block_forward.1} parent=23 // pred_check
        %p250 = pneg %p45
      $region26: #{conv_block_forward.1} parent=23 // pred_check_branch
        %252 = sbr.rel (%p250) target = $region28
      $region27: #{conv_block_forward.1} parent=23 // pred_region
        %p253 = scmp.lt.s32.totalorder %s20, 1
        %s254 = scalar_select %p253, %s20, 1
        %s255 = smul.addr %s254, 3
        %s256 = smul.addr %s255, 2
        %s257 = scalar_lea.vmem %s0, %s256
      $region28: #{conv_block_forward.1} parent=23 // pred_fallthru
        _
      // Predicated region
      $region29: #{conv_block_forward.1} parent=23 // pred_check
        %p258 = pneg %p71
      $region30: #{conv_block_forward.1} parent=23 // pred_check_branch
        %260 = sbr.rel (%p258) target = $region32
      $region31: #{conv_block_forward.1} parent=23 // pred_region
        %s261 = smul.u32 2, %s21
        %p262 = scmp.lt.s32.totalorder %s261, 3
        %s263 = scalar_select %p262, %s261, 3
        %s264 = smul.addr %s263, 4
        %s265 = scalar_lea.vmem %s1, %s264
        %s266 = smul.u32 2, %s21
      $region32: #{conv_block_forward.1} parent=23 // pred_fallthru
        _
      // Predicated region
      $region33: #{conv_block_forward.1} parent=23 // pred_check
        %p267 = pneg %p139
      $region34: #{conv_block_forward.1} parent=23 // pred_check_branch
        %269 = sbr.rel (%p267) target = $region36
      $region35: #{conv_block_forward.1} parent=23 // pred_region
        %s270 = smul.u32 2, %s21
        %p271 = scmp.lt.s32.totalorder %s270, 3
        %s272 = scalar_select %p271, %s270, 3
        %s273 = smul.addr %s272, 8
        %s274 = scalar_lea.vmem %s4, %s273
        %s275 = smul.u32 2, %s21
      $region36: #{conv_block_forward.1} parent=23 // pred_fallthru
        _
      // Predicated region
      $region37: #{conv_block_forward.1} parent=23 // pred_check
        %p276 = pneg %p165
      $region38: #{conv_block_forward.1} parent=23 // pred_check_branch
        %278 = sbr.rel (%p276) target = $region40
      $region39: #{conv_block_forward.1} parent=23 // pred_region
        %s279 = smul.u32 2, %s21
        %p280 = scmp.lt.s32.totalorder %s279, 3
        %s281 = scalar_select %p280, %s279, 3
        %s282 = smul.addr %s281, 8
        %s283 = scalar_lea.vmem %s5, %s282
        %s284 = smul.u32 2, %s21
      $region40: #{conv_block_forward.1} parent=23 // pred_fallthru
        _
      // Predicated region
      $region41: #{conv_block_forward.1} parent=23 // pred_check
        %p285 = pneg %p191
      $region42: #{conv_block_forward.1} parent=23 // pred_check_branch
        %287 = sbr.rel (%p285) target = $region44
      $region43: #{conv_block_forward.1} parent=23 // pred_region
        %s288 = smul.u32 2, %s21
        %p289 = scmp.lt.s32.totalorder %s288, 3
        %s290 = scalar_select %p289, %s288, 3
        %s291 = smul.addr %s290, 8
        %s292 = scalar_lea.vmem %s6, %s291
        %s293 = smul.u32 2, %s21
      $region44: #{conv_block_forward.1} parent=23 // pred_fallthru
        _
    $region24: #{conv_block_forward.1} parent=5 // pred_fallthru
      _
    %p294 = scmp.le.s32.totalorder 1, %s13
    %p295 = scmp.lt.s32.totalorder %s13, 5
    %p296 = pnand %p294, %p295
    %p297 = pneg %p296
    // Predicated region
    $region45: #{conv_block_forward.1} parent=5 // pred_check
      _
    $region46: #{conv_block_forward.1} parent=5 // pred_check_branch
      %299 = sbr.rel (%p296) target = $region48
    $region47: #{conv_block_forward.1} parent=5 // pred_region
      %s300 = ssub.s32 %s13, 1
      %p301 = scmp.lt.s32.totalorder %s22, 1
      %s302 = scalar_select %p301, %s22, 1
      %s303 = smul.addr %s302, 3
      %s304 = smul.addr %s303, 2
      %s305 = scalar_lea.vmem %s0, %s304
      %p306 = pneg %p51
      %p307 = pneg %p48
      %s308 = smul.u32 2, %s23
      %p309 = scmp.lt.s32.totalorder %s308, 3
      %s310 = scalar_select %p309, %s308, 3
      %s311 = smul.addr %s310, 4
      %s312 = scalar_lea.vmem %s1, %s311
      %p313 = pneg %p77
      %p314 = pneg %p74
      %p315 = pneg %p98
      %p316 = pneg %p95
      %p317 = pneg %p119
      %p318 = pneg %p116
      %s319 = smul.u32 2, %s23
      %p320 = scmp.lt.s32.totalorder %s319, 3
      %s321 = scalar_select %p320, %s319, 3
      %s322 = smul.addr %s321, 8
      %s323 = scalar_lea.vmem %s4, %s322
      %p324 = pneg %p145
      %p325 = pneg %p142
      %s326 = smul.u32 2, %s23
      %p327 = scmp.lt.s32.totalorder %s326, 3
      %s328 = scalar_select %p327, %s326, 3
      %s329 = smul.addr %s328, 8
      %s330 = scalar_lea.vmem %s5, %s329
      %p331 = pneg %p171
      %p332 = pneg %p168
      %s333 = smul.u32 2, %s23
      %p334 = scmp.lt.s32.totalorder %s333, 3
      %s335 = scalar_select %p334, %s333, 3
      %s336 = smul.addr %s335, 8
      %s337 = scalar_lea.vmem %s6, %s336
      %p338 = pneg %p197
      %p339 = pneg %p194
      %p340 = pneg %p225
      %p341 = pneg %p222
      %s342 = smul.u32 2, %s23
      %p343 = scmp.lt.s32.totalorder %s22, 1
      %s344 = scalar_select %p343, %s22, 1
      %p345 = scmp.lt.s32.totalorder %s342, 3
      %s346 = scalar_select %p345, %s342, 3
      %s347 = smul.addr %s346, 2
      %s348 = smul.addr %s344, 8
      %s349 = sadd.s32 %s347, %s348
      %s350 = smul.addr %s349, 8
      %s351 = scalar_lea.vmem %s7, %s350
      %p352 = scmp.lt.s32.totalorder %s22, 1
      %s353 = scalar_select %p352, %s22, 1
      %s354 = smul.addr %s353, 3
      %s355 = smul.addr %s354, 2
      %s356 = scalar_lea.vmem %s0, %s355
      %s357 = smul.u32 2, %s23
      %p358 = scmp.lt.s32.totalorder %s357, 3
      %s359 = scalar_select %p358, %s357, 3
      %s360 = smul.addr %s359, 4
      %s361 = scalar_lea.vmem %s1, %s360
      %s362 = smul.u32 2, %s23
      %s363 = smul.u32 2, %s23
      %p364 = scmp.lt.s32.totalorder %s363, 3
      %s365 = scalar_select %p364, %s363, 3
      %s366 = smul.addr %s365, 8
      %s367 = scalar_lea.vmem %s4, %s366
      %s368 = smul.u32 2, %s23
      %s369 = smul.u32 2, %s23
      %p370 = scmp.lt.s32.totalorder %s369, 3
      %s371 = scalar_select %p370, %s369, 3
      %s372 = smul.addr %s371, 8
      %s373 = scalar_lea.vmem %s5, %s372
      %s374 = smul.u32 2, %s23
      %s375 = smul.u32 2, %s23
      %p376 = scmp.lt.s32.totalorder %s375, 3
      %s377 = scalar_select %p376, %s375, 3
      %s378 = smul.addr %s377, 8
      %s379 = scalar_lea.vmem %s6, %s378
      %s380 = smul.u32 2, %s23
      %s381 = smul.u32 2, %s23
      %p382 = scmp.lt.s32.totalorder %s22, 1
      %s383 = scalar_select %p382, %s22, 1
      %p384 = scmp.lt.s32.totalorder %s381, 3
      %s385 = scalar_select %p384, %s381, 3
      %s386 = smul.addr %s385, 2
      %s387 = smul.addr %s383, 8
      %s388 = sadd.s32 %s386, %s387
      %s389 = smul.addr %s388, 8
      %s390 = scalar_lea.vmem %s7, %s389
      %s391 = smul.u32 2, %s23
      %v393 = vld [vmem:[%s3] sm:$0x3]
      %395 = vst [vmem:[#allocation1] ss:$9 sm:$0xff] %v393
      %v396 = vld [vmem:[#allocation1] sm:$0xff]
      %v397 = vld [vmem:[#allocation1 + $0x9] sm:$0xff]
      %v398 = vpack.i.b16 %v396, %v396
      %v400 = vperm.slane %v398, 0
      %v401 = vpack.i.b16 %v397, %v397
      %v403 = vperm.slane %v401, 0
      %404 = vst [vmem:[#allocation1] ss:$9 sm:$0xff] %v393
      %v405 = vld [vmem:[#allocation1] sm:$0xff]
      %v406 = vld [vmem:[#allocation1 + $0x9] sm:$0xff]
      %v407 = vshrl.u32 %v405, 16
      %v408 = vpack.i.b16 %v407, %v407
      %v410 = vperm.slane %v408, 0
      %v411 = vshrl.u32 %v406, 16
      %v412 = vpack.i.b16 %v411, %v411
      %v414 = vperm.slane %v412, 0
      %v415 = vld [vmem:[%s356] sm:$0xf]
      %v416 = vunpack.c.l.bf16 %v415
      %v417 = vunpack.c.l.bf16 %v400
      %v418 = vunpack.c.l.bf16 %v403
      %v421 = vrot.slane %v418, 4
      %vm422 = vcmask 1043456
      %v423 = vsel %vm422, %v417, %v421
      %v425 = vmul.f32 %v416, %v423
      %427 = vst [vmem:[#allocation1] ss:$2 sm:$0xff] %v425
      %v428 = vld.sshfl [vmem:[#allocation1] sm:$0xff pattern:$0x75316420]
      %v429 = vld.sshfl [vmem:[#allocation1 + $0x8] sm:$0xff pattern:$0x75316420]
      %v432 = vpack.c.bf16 %v429, %v428
      %433 = vst [vmem:[#allocation2] sm:$0x33] %v432
      %v434 = vld [vmem:[%s356] sm:$0x3f]
      %s436 = scalar_lea.vmem [#allocation1], 1
      %437 = vst [vmem:[%s436] ss:$2 sm:$0xff] %v434
      %v438 = vld.sshfl [vmem:[#allocation1] sm:$0xff pattern:$0x75643120]
      %v440 = vld.sshfl [vmem:[#allocation1 + $0x8] sm:$0xff pattern:$0x75643120]
      %442 = vrot.lane.b32.xlu0 %v438, 127
      %v443 = vpop.permute.xlu0 %442
      %444 = vrot.lane.b32.xlu0 %v440, 127
      %v445 = vpop.permute.xlu0 %444
      %v446 = vrot.slane %v443, 4
      %v447 = vrot.slane %v445, 4
      %vm448 = vcmask 1043456
      %v449 = vsel %vm448, %v446, %v447
      %vm450 = vcmask 1039360
      %v451 = vsel %vm450, %v443, %v449
      %453 = vst [vmem:[#allocation2] sm:$0xcc] %v451
      %v454 = vld [vmem:[%s356] sm:$0x3f]
      %v455 = vunpack.c.l.bf16 %v454
      %v456 = vunpack.c.h.bf16 %v454
      %v457 = vunpack.c.l.bf16 %v410
      %v458 = vunpack.c.l.bf16 %v414
      %v461 = vrot.slane %v458, 4
      %v462 = vsel %vm422, %v457, %v461
      %463 = vrot.lane.b32.xlu0 %v462, 2
      %v464 = vpop.permute.xlu0 %463
      %v465 = vrot.slane %v464, 4
      %vm466 = vcmask 15360
      %v467 = vsel %vm466, %v465, %v464
      %v470 = vmul.f32 %v455, %v467
      %v471 = vmul.f32 %v456, %v465
      %474 = vst [vmem:[#allocation1] ss:$2 sm:$0xff] %v470
      %s475 = scalar_lea.vmem [#allocation1], 16
      %476 = vst [vmem:[%s475] ss:$2 sm:$0xff] %v471
      %v477 = vld.sshfl [vmem:[#allocation1] sm:$0xff pattern:$0x75316420]
      %v478 = vld.sshfl [vmem:[#allocation1 + $0x8] sm:$0xff pattern:$0x75316420]
      %v479 = vld.sshfl [vmem:[#allocation1 + $0x10] sm:$0xff pattern:$0x75316420]
      %v483 = vpack.c.bf16 %v478, %v477
      %v484 = vpack.c.bf16 %v479, %v479
      %487 = vrot.lane.b32.xlu0 %v483, 126
      %v488 = vpop.permute.xlu0 %487
      %489 = vrot.lane.b32.xlu0 %v484, 126
      %v490 = vpop.permute.xlu0 %489
      %v491 = vrot.slane %v488, 4
      %v492 = vrot.slane %v490, 4
      %v493 = vsel %vm448, %v491, %v492
      %vm494 = vcmask 1031168
      %v495 = vsel %vm494, %v488, %v493
      %497 = vst [vmem:[#allocation2 + $0x8] sm:$0x33] %v495
      %v498 = vld [vmem:[%s356] sm:$0x3f]
      %v499 = vunpack.c.l.bf16 %v498
      %v500 = vunpack.c.h.bf16 %v498
      %501 = vrot.lane.b32.xlu0 %v423, 16
      %v502 = vpop.permute.xlu0 %501
      %v503 = vrot.slane %v502, 4
      %vm504 = vcmask 130048
      %v505 = vsel %vm504, %v503, %v502
      %v508 = vmul.f32 %v499, %v505
      %v509 = vmul.f32 %v500, %v503
      %512 = vst [vmem:[#allocation1] ss:$2 sm:$0xff] %v508
      %s513 = scalar_lea.vmem [#allocation1], 16
      %514 = vst [vmem:[%s513] ss:$2 sm:$0xff] %v509
      %v515 = vld.sshfl [vmem:[#allocation1] sm:$0xff pattern:$0x75316420]
      %v516 = vld.sshfl [vmem:[#allocation1 + $0x8] sm:$0xff pattern:$0x75316420]
      %v517 = vld.sshfl [vmem:[#allocation1 + $0x10] sm:$0xff pattern:$0x75316420]
      %v521 = vpack.c.bf16 %v516, %v515
      %v522 = vpack.c.bf16 %v517, %v517
      %v525 = vrot.slane %v521, 6
      %v526 = vrot.slane %v522, 6
      %527 = vrot.lane.b32.xlu0 %v525, 112
      %v528 = vpop.permute.xlu0 %527
      %529 = vrot.lane.b32.xlu0 %v526, 112
      %v530 = vpop.permute.xlu0 %529
      %v531 = vrot.slane %v528, 4
      %v532 = vrot.slane %v530, 4
      %v533 = vsel %vm448, %v531, %v532
      %vm534 = vcmask 916480
      %v535 = vsel %vm534, %v528, %v533
      %537 = vst [vmem:[#allocation2 + $0x8] sm:$0xcc] %v535
      %v538 = vld [vmem:[%s356] sm:$0x3f]
      %540 = vst [vmem:[#allocation1] ss:$2 sm:$0xff] %v538
      %v541 = vld.sshfl [vmem:[#allocation1] sm:$0xff pattern:$0x75643120]
      %v543 = vld.sshfl [vmem:[#allocation1 + $0x8] sm:$0xff pattern:$0x75643120]
      %545 = vrot.lane.b32.xlu0 %v541, 111
      %v546 = vpop.permute.xlu0 %545
      %547 = vrot.lane.b32.xlu0 %v543, 111
      %v548 = vpop.permute.xlu0 %547
      %v549 = vrot.slane %v546, 4
      %v550 = vrot.slane %v548, 4
      %v551 = vsel %vm448, %v549, %v550
      %vm552 = vcmask 908288
      %v553 = vsel %vm552, %v546, %v551
      %555 = vst [vmem:[#allocation2 + $0x10] sm:$0x33] %v553
      %v556 = vld [vmem:[%s356] sm:$0x3f]
      %v557 = vunpack.c.l.bf16 %v556
      %v558 = vunpack.c.h.bf16 %v556
      %559 = vrot.lane.b32.xlu0 %v462, 18
      %v560 = vpop.permute.xlu0 %559
      %v561 = vrot.slane %v560, 4
      %vm562 = vcmask 146432
      %v563 = vsel %vm562, %v561, %v560
      %v566 = vmul.f32 %v557, %v563
      %v567 = vmul.f32 %v558, %v561
      %570 = vst [vmem:[#allocation1] ss:$2 sm:$0xff] %v566
      %s571 = scalar_lea.vmem [#allocation1], 16
      %572 = vst [vmem:[%s571] ss:$2 sm:$0xff] %v567
      %v573 = vld.sshfl [vmem:[#allocation1] sm:$0xff pattern:$0x75316420]
      %v574 = vld.sshfl [vmem:[#allocation1 + $0x8] sm:$0xff pattern:$0x75316420]
      %v575 = vld.sshfl [vmem:[#allocation1 + $0x10] sm:$0xff pattern:$0x75316420]
      %v579 = vpack.c.bf16 %v574, %v573
      %v580 = vpack.c.bf16 %v575, %v575
      %v583 = vrot.slane %v579, 6
      %v584 = vrot.slane %v580, 6
      %585 = vrot.lane.b32.xlu0 %v583, 110
      %v586 = vpop.permute.xlu0 %585
      %587 = vrot.lane.b32.xlu0 %v584, 110
      %v588 = vpop.permute.xlu0 %587
      %v589 = vrot.slane %v586, 4
      %v590 = vrot.slane %v588, 4
      %v591 = vsel %vm448, %v589, %v590
      %vm592 = vcmask 900096
      %v593 = vsel %vm592, %v586, %v591
      %595 = vst [vmem:[#allocation2 + $0x10] sm:$0xcc] %v593
      %v596 = vld [vmem:[%s356] sm:$0x3f]
      %v597 = vunpack.c.l.bf16 %v596
      %v598 = vunpack.c.h.bf16 %v596
      %599 = vrot.lane.b32.xlu0 %v423, 32
      %v600 = vpop.permute.xlu0 %599
      %v601 = vrot.slane %v600, 4
      %vm602 = vcmask 261120
      %v603 = vsel %vm602, %v601, %v600
      %v606 = vmul.f32 %v597, %v603
      %v607 = vmul.f32 %v598, %v601
      %610 = vst [vmem:[#allocation1] ss:$2 sm:$0xff] %v606
      %s611 = scalar_lea.vmem [#allocation1], 16
      %612 = vst [vmem:[%s611] ss:$2 sm:$0xff] %v607
      %v613 = vld.sshfl [vmem:[#allocation1] sm:$0xff pattern:$0x75316420]
      %v614 = vld.sshfl [vmem:[#allocation1 + $0x8] sm:$0xff pattern:$0x75316420]
      %v615 = vld.sshfl [vmem:[#allocation1 + $0x10] sm:$0xff pattern:$0x75316420]
      %v619 = vpack.c.bf16 %v614, %v613
      %v620 = vpack.c.bf16 %v615, %v615
      %623 = vrot.lane.b32.xlu0 %v619, 96
      %v624 = vpop.permute.xlu0 %623
      %625 = vrot.lane.b32.xlu0 %v620, 96
      %v626 = vpop.permute.xlu0 %625
      %v627 = vrot.slane %v624, 4
      %v628 = vrot.slane %v626, 4
      %v629 = vsel %vm448, %v627, %v628
      %vm630 = vcmask 785408
      %v631 = vsel %vm630, %v624, %v629
      %633 = vst [vmem:[#allocation2 + $0x18] sm:$0x33] %v631
      %v634 = vld [vmem:[%s356] sm:$0x3f]
      %s636 = scalar_lea.vmem [#allocation1], 1
      %637 = vst [vmem:[%s636] ss:$2 sm:$0xff] %v634
      %v638 = vld.sshfl [vmem:[#allocation1] sm:$0xff pattern:$0x75643120]
      %v640 = vld.sshfl [vmem:[#allocation1 + $0x8] sm:$0xff pattern:$0x75643120]
      %642 = vrot.lane.b32.xlu0 %v638, 95
      %v643 = vpop.permute.xlu0 %642
      %644 = vrot.lane.b32.xlu0 %v640, 95
      %v645 = vpop.permute.xlu0 %644
      %v646 = vrot.slane %v643, 4
      %v647 = vrot.slane %v645, 4
      %v648 = vsel %vm448, %v646, %v647
      %vm649 = vcmask 777216
      %v650 = vsel %vm649, %v643, %v648
      %652 = vst [vmem:[#allocation2 + $0x18] sm:$0xcc] %v650
      %v653 = vld [vmem:[%s356] sm:$0x3f]
      %v654 = vunpack.c.l.bf16 %v653
      %v655 = vunpack.c.h.bf16 %v653
      %656 = vrot.lane.b32.xlu0 %v462, 34
      %v657 = vpop.permute.xlu0 %656
      %v658 = vrot.slane %v657, 4
      %vm659 = vcmask 277504
      %v660 = vsel %vm659, %v658, %v657
      %v663 = vmul.f32 %v654, %v660
      %v664 = vmul.f32 %v655, %v658
      %667 = vst [vmem:[#allocation1] ss:$2 sm:$0xff] %v663
      %s668 = scalar_lea.vmem [#allocation1], 16
      %669 = vst [vmem:[%s668] ss:$2 sm:$0xff] %v664
      %v670 = vld.sshfl [vmem:[#allocation1] sm:$0xff pattern:$0x75316420]
      %v671 = vld.sshfl [vmem:[#allocation1 + $0x8] sm:$0xff pattern:$0x75316420]
      %v672 = vld.sshfl [vmem:[#allocation1 + $0x10] sm:$0xff pattern:$0x75316420]
      %v676 = vpack.c.bf16 %v671, %v670
      %v677 = vpack.c.bf16 %v672, %v672
      %680 = vrot.lane.b32.xlu0 %v676, 94
      %v681 = vpop.permute.xlu0 %680
      %682 = vrot.lane.b32.xlu0 %v677, 94
      %v683 = vpop.permute.xlu0 %682
      %v684 = vrot.slane %v681, 4
      %v685 = vrot.slane %v683, 4
      %v686 = vsel %vm448, %v684, %v685
      %vm687 = vcmask 769024
      %v688 = vsel %vm687, %v681, %v686
      %690 = vst [vmem:[#allocation2 + $0x20] sm:$0x33] %v688
      %v691 = vld [vmem:[%s361] sm:$0xf]
      %v692 = vld [vmem:[%s361 + $0x4] sm:$0xf]
      %v693 = vld [vmem:[#allocation2] sm:$0xff]
      %v694 = vld [vmem:[#allocation2 + $0x8] sm:$0xff]
      %v695 = vld [vmem:[#allocation2 + $0x10] sm:$0xff]
      %v696 = vld [vmem:[#allocation2 + $0x18] sm:$0xff]
      %v697 = vld [vmem:[#allocation2 + $0x20] sm:$0x33]
      %v698 = vld [vmem:[%s367] sm:$0xff]
      %v699 = vld [vmem:[%s367 + $0x8] sm:$0xff]
      %701 = vset.pattern.permute.xlu0 0
      %702 = vperm.xlu0 %701, %v698
      %v703 = vpop.permute.xlu0 %702
      %706 = vset.pattern.permute.xlu0 0
      %707 = vperm.xlu0 %706, %v699
      %v708 = vpop.permute.xlu0 %707
      %v712 = vunpack.c.l.b16 %v691
      %v713 = vunpack.c.l.b16 %v692
      %v714 = vpack.c.b16 %v713, %v712
      %v720 = vunpack.c.l.b16 %v693
      %v721 = vunpack.c.h.b16 %v693
      %v722 = vunpack.c.l.b16 %v694
      %v723 = vunpack.c.h.b16 %v694
      %v724 = vunpack.c.l.b16 %v695
      %v725 = vunpack.c.h.b16 %v695
      %v726 = vunpack.c.l.b16 %v696
      %v727 = vunpack.c.h.b16 %v696
      %v728 = vunpack.c.l.b16 %v697
      %v729 = vunpack.c.h.b16 %v697
      %v730 = vpack.c.b16 %v722, %v720
      %v731 = vpack.c.b16 %v723, %v721
      %v732 = vpack.c.b16 %v726, %v724
      %v733 = vpack.c.b16 %v727, %v725
      %v734 = vpack.c.b16 %v728, %v728
      %v735 = vpack.c.b16 %v729, %v729
      %vm740 = vcmask 293888
      %v742 = vsel %vm740, %v714, 0
      %vm744 = vcmask 1041408
      %v746 = vsel %vm744, %v734, 0
      %v749 = vsel %vm744, %v735, 0
      %751 = vmatpush.bf16.msra.mxu0 0
      %752 = vmatpush.bf16.msra.mxu0 0
      %753 = vmatpush.bf16.msra.mxu0 0
      %754 = vmatpush.bf16.msra.mxu0 0
      %755 = vmatpush.bf16.msra.mxu0 0
      %756 = vmatpush.bf16.msra.mxu0 %v746
      %757 = vmatpush.bf16.msra.mxu0 %v732
      %758 = vmatpush.bf16.msra.mxu0 %v730
      %759 = vmatmul.bf16.gmra.mxu0 %v742
      %v760 = vpop.f32.mrf.mxu0
      %v761 = vadd.f32 %v703, %v760
      %v762 = vpop.f32.mrf.mxu0
      %v763 = vadd.f32 %v708, %v762
      %764 = vdwg.mxu0
      %765 = vmatpush.bf16.msra.mxu0 0
      %766 = vmatpush.bf16.msra.mxu0 0
      %767 = vmatpush.bf16.msra.mxu0 0
      %768 = vmatpush.bf16.msra.mxu0 0
      %769 = vmatpush.bf16.msra.mxu0 0
      %770 = vmatpush.bf16.msra.mxu0 %v749
      %771 = vmatpush.bf16.msra.mxu0 %v733
      %772 = vmatpush.bf16.msra.mxu0 %v731
      %773 = vmatmul.bf16.gmra.mxu0 %v742
      %v774 = vpop.f32.mrf.mxu0
      %v775 = vadd.f32 %v703, %v774
      %v776 = vpop.f32.mrf.mxu0
      %v777 = vadd.f32 %v708, %v776
      %778 = vdwg.mxu0
      %v779 = vld [vmem:[%s2] sm:$0xff]
      %v780 = vld [vmem:[%s2 + $0x8] sm:$0xff]
      %v782 = vsel %vm504, %v779, 0
      %v785 = vsel %vm504, %v780, 0
      %787 = vmatpush.msra.mxu0 0.0
      %788 = vmatpush.msra.mxu0 0.0
      %789 = vmatpush.msra.mxu0 0.0
      %790 = vmatpush.msra.mxu0 0.0
      %791 = vmatpush.msra.mxu0 0.0
      %792 = vmatpush.msra.mxu0 0.0
      %793 = vmatpush.msra.mxu0 0.0
      %794 = vmatpush.msra.mxu0 0.0
      %795 = vmatpush.msra.mxu0 0.0
      %796 = vmatpush.msra.mxu0 0.0
      %797 = vmatpush.msra.mxu0 0.0
      %798 = vmatpush.msra.mxu0 0.0
      %799 = vmatpush.msra.mxu0 0.0
      %800 = vmatpush.msra.mxu0 0.0
      %801 = vmatpush.msra.mxu0 %v763
      %802 = vmatpush.msra.mxu0 %v761
      %803 = vmatmul.f32.gmra.mxu0 %v782
      %v804 = vpop.f32.mrf.mxu0
      %v805 = vadd.f32 0.0, %v804
      %806 = vmatmul.f32.gmra.mxu0 %v785
      %v807 = vpop.f32.mrf.mxu0
      %v808 = vadd.f32 0.0, %v807
      %809 = vdwg.mxu0
      %810 = vmatpush.msra.mxu0 0.0
      %811 = vmatpush.msra.mxu0 0.0
      %812 = vmatpush.msra.mxu0 0.0
      %813 = vmatpush.msra.mxu0 0.0
      %814 = vmatpush.msra.mxu0 0.0
      %815 = vmatpush.msra.mxu0 0.0
      %816 = vmatpush.msra.mxu0 0.0
      %817 = vmatpush.msra.mxu0 0.0
      %818 = vmatpush.msra.mxu0 0.0
      %819 = vmatpush.msra.mxu0 0.0
      %820 = vmatpush.msra.mxu0 0.0
      %821 = vmatpush.msra.mxu0 0.0
      %822 = vmatpush.msra.mxu0 0.0
      %823 = vmatpush.msra.mxu0 0.0
      %824 = vmatpush.msra.mxu0 %v777
      %825 = vmatpush.msra.mxu0 %v775
      %826 = vmatmul.f32.gmra.mxu0 %v782
      %v827 = vpop.f32.mrf.mxu0
      %v828 = vadd.f32 0.0, %v827
      %829 = vmatmul.f32.gmra.mxu0 %v785
      %v830 = vpop.f32.mrf.mxu0
      %v831 = vadd.f32 0.0, %v830
      %832 = vdwg.mxu0
      %v833 = vadd.f32 %v805, %v828
      %834 = vadd.xlane.f32.xlu0 %v833
      %v835 = vpop.xlane.xlu0 %834
      %v836 = vadd.f32 %v808, %v831
      %837 = vadd.xlane.f32.xlu0 %v836
      %v838 = vpop.xlane.xlu0 %837
      %v839 = vmul.f32 %v761, %v761
      %v840 = vmul.f32 %v775, %v775
      %v841 = vmul.f32 %v763, %v763
      %v842 = vmul.f32 %v777, %v777
      %843 = vmatpush.msra.mxu0 0.0
      %844 = vmatpush.msra.mxu0 0.0
      %845 = vmatpush.msra.mxu0 0.0
      %846 = vmatpush.msra.mxu0 0.0
      %847 = vmatpush.msra.mxu0 0.0
      %848 = vmatpush.msra.mxu0 0.0
      %849 = vmatpush.msra.mxu0 0.0
      %850 = vmatpush.msra.mxu0 0.0
      %851 = vmatpush.msra.mxu0 0.0
      %852 = vmatpush.msra.mxu0 0.0
      %853 = vmatpush.msra.mxu0 0.0
      %854 = vmatpush.msra.mxu0 0.0
      %855 = vmatpush.msra.mxu0 0.0
      %856 = vmatpush.msra.mxu0 0.0
      %857 = vmatpush.msra.mxu0 %v841
      %858 = vmatpush.msra.mxu0 %v839
      %859 = vmatmul.f32.gmra.mxu0 %v782
      %v860 = vpop.f32.mrf.mxu0
      %v861 = vadd.f32 0.0, %v860
      %862 = vmatmul.f32.gmra.mxu0 %v785
      %v863 = vpop.f32.mrf.mxu0
      %v864 = vadd.f32 0.0, %v863
      %865 = vdwg.mxu0
      %866 = vmatpush.msra.mxu0 0.0
      %867 = vmatpush.msra.mxu0 0.0
      %868 = vmatpush.msra.mxu0 0.0
      %869 = vmatpush.msra.mxu0 0.0
      %870 = vmatpush.msra.mxu0 0.0
      %871 = vmatpush.msra.mxu0 0.0
      %872 = vmatpush.msra.mxu0 0.0
      %873 = vmatpush.msra.mxu0 0.0
      %874 = vmatpush.msra.mxu0 0.0
      %875 = vmatpush.msra.mxu0 0.0
      %876 = vmatpush.msra.mxu0 0.0
      %877 = vmatpush.msra.mxu0 0.0
      %878 = vmatpush.msra.mxu0 0.0
      %879 = vmatpush.msra.mxu0 0.0
      %880 = vmatpush.msra.mxu0 %v842
      %881 = vmatpush.msra.mxu0 %v840
      %882 = vmatmul.f32.gmra.mxu0 %v782
      %v883 = vpop.f32.mrf.mxu0
      %v884 = vadd.f32 0.0, %v883
      %885 = vmatmul.f32.gmra.mxu0 %v785
      %v886 = vpop.f32.mrf.mxu0
      %v887 = vadd.f32 0.0, %v886
      %888 = vdwg.mxu0
      %v889 = vadd.f32 %v861, %v884
      %890 = vadd.xlane.f32.xlu0 %v889
      %v891 = vpop.xlane.xlu0 %890
      %v892 = vadd.f32 %v864, %v887
      %893 = vadd.xlane.f32.xlu0 %v892
      %v894 = vpop.xlane.xlu0 %893
      %v895 = vmul.f32 %v835, 0.0009765625
      %v896 = vmul.f32 %v838, 0.0009765625
      %v897 = vmul.f32 %v891, 0.0009765625
      %v898 = vmul.f32 %v894, 0.0009765625
      %v899 = vmul.f32 %v895, %v895
      %v900 = vmul.f32 %v896, %v896
      %v901 = vsub.f32 %v897, %v899
      %v902 = vsub.f32 %v898, %v900
      %v903 = vmax.f32 %v901, 0.0
      %v904 = vmax.f32 %v902, 0.0
      %v905 = vadd.f32 %v903, 1e-05
      %v906 = vadd.f32 %v904, 1e-05
      %v907 = vrsqrt.pop %v905
      %v908 = vmul.f32 %v907, %v905
      %v909 = vmul.f32 %v908, %v907
      %v910 = vmul.f32 0.5, %v909
      %v911 = vsub.f32 1.5, %v910
      %v912 = vmul.f32 %v907, %v911
      %vm913 = vweird.f32 %v905
      %vm914 = vweird.f32 %v907
      %vm915 = vmor %vm913, %vm914
      %v916 = vsel %vm915, %v907, %v912
      %v917 = vrsqrt.pop %v906
      %v918 = vmul.f32 %v917, %v906
      %v919 = vmul.f32 %v918, %v917
      %v920 = vmul.f32 0.5, %v919
      %v921 = vsub.f32 1.5, %v920
      %v922 = vmul.f32 %v917, %v921
      %vm923 = vweird.f32 %v906
      %vm924 = vweird.f32 %v917
      %vm925 = vmor %vm923, %vm924
      %v926 = vsel %vm925, %v917, %v922
      %v927 = vld [vmem:[%s373] sm:$0xff]
      %v928 = vld [vmem:[%s373 + $0x8] sm:$0xff]
      %v929 = vmul.f32 %v916, %v927
      %v930 = vmul.f32 %v926, %v928
      %v931 = vld [vmem:[%s379] sm:$0xff]
      %v932 = vld [vmem:[%s379 + $0x8] sm:$0xff]
      %v933 = vmul.f32 %v895, %v929
      %v934 = vmul.f32 %v896, %v930
      %v935 = vsub.f32 %v931, %v933
      %v936 = vsub.f32 %v932, %v934
      %938 = vset.pattern.permute.xlu0 0
      %939 = vperm.xlu0 %938, %v929
      %v940 = vpop.permute.xlu0 %939
      %943 = vset.pattern.permute.xlu0 0
      %944 = vperm.xlu0 %943, %v930
      %v945 = vpop.permute.xlu0 %944
      %v947 = vmul.f32 %v761, %v940
      %v948 = vmul.f32 %v775, %v940
      %v949 = vmul.f32 %v763, %v945
      %v950 = vmul.f32 %v777, %v945
      %952 = vset.pattern.permute.xlu0 0
      %953 = vperm.xlu0 %952, %v935
      %v954 = vpop.permute.xlu0 %953
      %957 = vset.pattern.permute.xlu0 0
      %958 = vperm.xlu0 %957, %v936
      %v959 = vpop.permute.xlu0 %958
      %v961 = vadd.f32 %v947, %v954
      %v962 = vadd.f32 %v948, %v954
      %v963 = vadd.f32 %v949, %v959
      %v964 = vadd.f32 %v950, %v959
      %v965 = vmin.f32 %v961, 20.0
      %v966 = vmin.f32 %v962, 20.0
      %v967 = vmin.f32 %v963, 20.0
      %v968 = vmin.f32 %v964, 20.0
      %v969 = vmul.f32 %v965, 1.442695
      %v970 = vpow.pop %v969
      %v971 = vmul.f32 %v966, 1.442695
      %v972 = vpow.pop %v971
      %v973 = vmul.f32 %v967, 1.442695
      %v974 = vpow.pop %v973
      %v975 = vmul.f32 %v968, 1.442695
      %v976 = vpow.pop %v975
      %v977 = vadd.f32 %v970, 1.0
      %v978 = vadd.f32 %v972, 1.0
      %v979 = vadd.f32 %v974, 1.0
      %v980 = vadd.f32 %v976, 1.0
      %v981 = vmul.f32 %v977, %v977
      %v982 = vmul.f32 %v978, %v978
      %v983 = vmul.f32 %v979, %v979
      %v984 = vmul.f32 %v980, %v980
      %v985 = vsub.f32 %v981, 1.0
      %v986 = vsub.f32 %v982, 1.0
      %v987 = vsub.f32 %v983, 1.0
      %v988 = vsub.f32 %v984, 1.0
      %v989 = vmul.f32 %v961, %v985
      %v990 = vmul.f32 %v962, %v986
      %v991 = vmul.f32 %v963, %v987
      %v992 = vmul.f32 %v964, %v988
      %v993 = vadd.f32 %v981, 1.0
      %v994 = vadd.f32 %v982, 1.0
      %v995 = vadd.f32 %v983, 1.0
      %v996 = vadd.f32 %v984, 1.0
      %v997 = vrcp.pop %v993
      %v998 = vrcp.pop %v994
      %v999 = vrcp.pop %v995
      %v1000 = vrcp.pop %v996
      %v1001 = vmul.f32 %v989, %v997
      %v1002 = vmul.f32 %v990, %v998
      %v1003 = vmul.f32 %v991, %v999
      %v1004 = vmul.f32 %v992, %v1000
      %vm1005 = vcmp.gt.f32.partialorder %v961, 20.0
      %vm1006 = vcmp.gt.f32.partialorder %v962, 20.0
      %vm1007 = vcmp.gt.f32.partialorder %v963, 20.0
      %vm1008 = vcmp.gt.f32.partialorder %v964, 20.0
      %v1009 = vsel %vm1005, %v961, %v1001
      %v1010 = vsel %vm1006, %v962, %v1002
      %v1011 = vsel %vm1007, %v963, %v1003
      %v1012 = vsel %vm1008, %v964, %v1004
      %1013 = vst [vmem:[%s390] sm:$0xff] %v1009
      %1014 = vst [vmem:[%s390 + $0x8] sm:$0xff] %v1010
      %1015 = vst [vmem:[%s390 + $0x10] sm:$0xff] %v1011
      %1016 = vst [vmem:[%s390 + $0x18] sm:$0xff] %v1012
      %s1017 = smul.u32 2, %s23
      %p1018 = scmp.lt.s32.totalorder %s22, 1
      %s1019 = scalar_select %p1018, %s22, 1
      %p1020 = scmp.lt.s32.totalorder %s1017, 3
      %s1021 = scalar_select %p1020, %s1017, 3
      %s1022 = smul.addr %s1021, 2
      %s1023 = smul.addr %s1019, 8
      %s1024 = sadd.s32 %s1022, %s1023
      %s1025 = smul.addr %s1024, 8
      %s1026 = scalar_lea.vmem %s7, %s1025
      // Predicated region
      $region49: #{conv_block_forward.1} parent=47 // pred_check
        %p1027 = pneg %p222
      $region50: #{conv_block_forward.1} parent=47 // pred_check_branch
        %1029 = sbr.rel (%p1027) target = $region52
      $region51: #{conv_block_forward.1} parent=47 // pred_region
        %s1030 = smul.u32 2, %s23
      $region52: #{conv_block_forward.1} parent=47 // pred_fallthru
        _
    $region48: #{conv_block_forward.1} parent=5 // pred_fallthru
      _
    %p1031 = scmp.le.s32.totalorder 2, %s13
    // Predicated region
    $region53: #{conv_block_forward.1} parent=5 // pred_check
      %p1032 = pneg %p1031
    $region54: #{conv_block_forward.1} parent=5 // pred_check_branch
      %1034 = sbr.rel (%p1032) target = $region56
    $region55: #{conv_block_forward.1} parent=5 // pred_region
      %s1035 = ssub.s32 %s13, 2
      // Predicated region
      $region57: #{conv_block_forward.1} parent=55 // pred_check
        %p1036 = pneg %p228
      $region58: #{conv_block_forward.1} parent=55 // pred_check_branch
        %1038 = sbr.rel (%p1036) target = $region60
      $region59: #{conv_block_forward.1} parent=55 // pred_region
        %s1039 = smul.u32 2, %s25
        %p1040 = scmp.lt.s32.totalorder %s24, 1
        %s1041 = scalar_select %p1040, %s24, 1
        %p1042 = scmp.lt.s32.totalorder %s1039, 3
        %s1043 = scalar_select %p1042, %s1039, 3
        %s1044 = smul.addr %s1043, 2
        %s1045 = smul.addr %s1041, 8
        %s1046 = sadd.s32 %s1044, %s1045
        %s1047 = smul.addr %s1046, 8
        %s1048 = scalar_lea.vmem %s7, %s1047
      $region60: #{conv_block_forward.1} parent=55 // pred_fallthru
        _
    $region56: #{conv_block_forward.1} parent=5 // pred_fallthru
      _
  $region6: #{conv_block_forward.1} parent=0 // loop_footer
    %s17 = sadd.s32 1, %s13
  $region7: #{conv_block_forward.1} parent=0 // loop_footer_branch
    %12 = sbr.rel target = $region3
  $region8: #{conv_block_forward.1} parent=0 // loop_exit
    _

</llo_original>
